<compile_context>
chip_gen: v7x
topology: tpu7x:2x2x1
jax: 0.10.0
libtpu: 0.0.40
codegen_flags: <defaults>
</compile_context>

<pallas_src>
import functools

import jax
import jax.numpy as jnp
from jax.experimental import pallas as pl
from jax.experimental.pallas import tpu as pltpu


# ---------------------------------------------------------------------------
# Constant operators (built wrapper-side, constant-folded under jit)
# ---------------------------------------------------------------------------
def _interp_matrix(in_size, out_size):
    """Dense (out, in) bilinear interpolation matrix, PyTorch align_corners=False."""
    scale = in_size / out_size
    dst = jnp.arange(out_size, dtype=jnp.float32)
    src = jnp.maximum((dst + 0.5) * scale - 0.5, 0.0)        # PyTorch clamps at 0
    i0 = jnp.clip(jnp.floor(src).astype(jnp.int32), 0, in_size - 1)
    i1 = jnp.minimum(i0 + 1, in_size - 1)
    f = src - i0.astype(jnp.float32)
    return ((1.0 - f)[:, None] * jax.nn.one_hot(i0, in_size, dtype=jnp.float32)
            + f[:, None] * jax.nn.one_hot(i1, in_size, dtype=jnp.float32))


def _upsample_pad_operator(hin, win, out_size, pad, kw):
    """(Hin*Win, Hpad*Wpad + kw-1) operator: fused bilinear upsample + zero pad.

    x_up_pad_flat = x_flat @ A, with flat spatial on the lane axis. The kw-1
    trailing zero lanes keep the in-kernel flat-domain im2col slices in bounds.
    """
    hp, wp = out_size + 2 * pad, out_size + 2 * pad
    uph = jnp.zeros((hp, hin), jnp.float32).at[pad:pad + out_size].set(
        _interp_matrix(hin, out_size))
    upw = jnp.zeros((wp, win), jnp.float32).at[pad:pad + out_size].set(
        _interp_matrix(win, out_size))
    a = jnp.kron(uph, upw)                       # (Hpad*Wpad, Hin*Win)
    # TODO(synk): for large spatial sizes replace kron with separable row/col
    #             interpolation matmuls (scales O(H^2) instead of O(H^4)).
    return jnp.pad(a.T, ((0, 0), (0, kw - 1)))   # (Hin*Win, Hpad*Wpad + kw - 1)


# ---------------------------------------------------------------------------
# Pallas kernel: upsample+pad matmul -> im2col -> K=KH*KW*Cin conv matmul
#                -> bias -> ReLU, one batch item per grid step.
# ---------------------------------------------------------------------------
def _decoder_kernel(x_ref, at_ref, w_ref, b_ref, o_ref, patches_ref,
                    *, KH, KW, Wpad, Lj):
    # x_ref       : (1, Cin, Hin*Win)            f32  (channel-major, NCHW-native)
    # at_ref      : (Hin*Win, Hpad*Wpad + KW-1)  bf16 (fused upsample + zero pad)
    # w_ref       : (Cout, KH*KW*Cin)            bf16 ((kh, kw, cin)-ordered)
    # b_ref       : (Cout, 1)                    f32
    # o_ref       : (1, Cout, Lj=Hout*Wpad)      f32  (lane-dense; junk W columns)
    # patches_ref : (KH*KW*Cin, Lj)              f32  VMEM scratch (im2col matrix)
    cin = x_ref.shape[1]

    # 1) Fused bilinear upsample + zero pad: one lane-dense MXU matmul
    #    (bf16 operands, f32 accumulation).
    x = x_ref[0].astype(jnp.bfloat16)                           # (Cin, Hin*Win)
    xup = jax.lax.dot_general(
        x, at_ref[...],
        dimension_numbers=(((1,), (0,)), ((), ())),
        preferred_element_type=jnp.float32)                     # (Cin, Hpad*Wpad+KW-1)

    # 2) im2col in the flattened lane domain: KH*KW static contiguous lane
    #    slices (no spatial reshapes), stacked along sublanes in VMEM scratch.
    for r in range(KH):
        for c in range(KW):
            row0 = (r * KW + c) * cin
            s = r * Wpad + c
            patches_ref[row0:row0 + cin, :] = xup[:, s:s + Lj]

    # 3) Single K = KH*KW*Cin contraction on the MXU (bf16 in, f32 acc).
    acc = jax.lax.dot_general(
        w_ref[...], patches_ref[...].astype(jnp.bfloat16),
        dimension_numbers=(((1,), (0,)), ((), ())),
        preferred_element_type=jnp.float32)                     # (Cout, Lj)

    # 4) Bias + ReLU in f32. Dropout(0.2) is identity in eval mode.
    # TODO(synk): training-mode dropout (pltpu.prng_* masking) not implemented.
    acc = acc + b_ref[...]
    o_ref[0] = jnp.maximum(acc, 0.0).astype(o_ref.dtype)


# ---------------------------------------------------------------------------
# DecoderLayer forward
# ---------------------------------------------------------------------------
def init_decoder_params(key, in_channels, out_channels, kernel_size=4):
    # PyTorch Conv2d default init: U(-b, b), b = 1/sqrt(fan_in); OIHW weight layout.
    fan_in = in_channels * kernel_size * kernel_size
    bound = 1.0 / (float(fan_in) ** 0.5)
    kw_, kb_ = jax.random.split(key)
    w = jax.random.uniform(
        kw_, (out_channels, in_channels, kernel_size, kernel_size),
        minval=-bound, maxval=bound, dtype=jnp.float32)
    b = jax.random.uniform(kb_, (out_channels,), minval=-bound, maxval=bound,
                           dtype=jnp.float32)
    return {"w": w, "b": b}


@functools.partial(jax.jit, static_argnames=("upsample_size", "kernel_size", "padding"))
def decoder_layer_forward(x_nchw, params, *, upsample_size, kernel_size=4, padding=2):
    n, cin, hin, win = x_nchw.shape
    w, b = params["w"], params["b"]
    cout = w.shape[0]
    kh = kw = kernel_size
    hp = wp = upsample_size + 2 * padding
    hout, wout = hp - kh + 1, wp - kw + 1
    lj = hout * wp                              # junk-extended flat output length

    # Constant operator + TPU-friendly parameter layouts (bf16 MXU operands).
    at = _upsample_pad_operator(hin, win, upsample_size, padding, kw).astype(jnp.bfloat16)
    w2 = jnp.transpose(w, (0, 2, 3, 1)).reshape(cout, kh * kw * cin).astype(jnp.bfloat16)
    b2 = b.reshape(cout, 1).astype(jnp.float32)
    xf = x_nchw.reshape(n, cin, hin * win)      # channel-major flat; no transpose

    kernel = functools.partial(_decoder_kernel, KH=kh, KW=kw, Wpad=wp, Lj=lj)
    y = pl.pallas_call(
        kernel,
        out_shape=jax.ShapeDtypeStruct((n, cout, lj), jnp.float32),
        grid=(n,),
        in_specs=[
            pl.BlockSpec((1, cin, hin * win), lambda i: (i, 0, 0)),
            pl.BlockSpec(at.shape, lambda i: (0, 0)),
            pl.BlockSpec((cout, kh * kw * cin), lambda i: (0, 0)),
            pl.BlockSpec((cout, 1), lambda i: (0, 0)),
        ],
        out_specs=pl.BlockSpec((1, cout, lj), lambda i: (i, 0, 0)),
        scratch_shapes=[pltpu.VMEM((kh * kw * cin, lj), jnp.float32)],
        compiler_params=pltpu.CompilerParams(dimension_semantics=("parallel",)),
        # TODO(synk): at production spatial sizes add an H-strip grid axis with a
        #             (KH-1)-row halo so blocks stay under v7x's 64 MiB VMEM.
    )(xf, at, w2, b2)

    # Strip the junk W columns introduced by flat-domain im2col; already NCHW.
    return y.reshape(n, cout, hout, wp)[:, :, :, :wout]


if __name__ == "__main__":
    key = jax.random.PRNGKey(0)
    kx, kp = jax.random.split(key)

    # Small shapes: batch=2, in_channels=4, spatial=8x8, upsample to 16,
    # out_channels=8, kernel=4, stride=1, padding=2 -> output (2, 8, 17, 17).
    N, CIN, HIN, WIN = 2, 4, 8, 8
    COUT, UP, KSZ, PAD = 8, 16, 4, 2

    x = jax.random.normal(kx, (N, CIN, HIN, WIN), dtype=jnp.float32)
    params = init_decoder_params(kp, CIN, COUT, kernel_size=KSZ)

    out = decoder_layer_forward(x, params, upsample_size=UP, kernel_size=KSZ, padding=PAD)
    out = jax.block_until_ready(out)

    assert out.shape == (N, COUT, UP + 1, UP + 1), out.shape
    assert bool(jnp.all(out >= 0.0))            # ReLU

    # Pure-XLA f32 reference (interp-matrix upsample + conv) — bf16 MXU tolerance.
    uh = _interp_matrix(HIN, UP)
    uw = _interp_matrix(WIN, UP)
    xup = jnp.einsum("uh,nchw->ncuw", uh, x)
    xup = jnp.einsum("vw,ncuw->ncuv", uw, xup)
    xpad = jnp.pad(xup, ((0, 0), (0, 0), (PAD, PAD), (PAD, PAD)))
    ref = jax.lax.conv_general_dilated(
        xpad, params["w"], (1, 1), "VALID",
        dimension_numbers=("NCHW", "OIHW", "NCHW"))
    ref = jnp.maximum(ref + params["b"][None, :, None, None], 0.0)
    assert bool(jnp.allclose(out, ref, atol=5e-2, rtol=5e-2)), \
        float(jnp.abs(out - ref).max())

    print("KERNEL_OK")
</pallas_src>

<mosaic_0001>
module attributes {stable_mosaic.version = 11 : i64} {
  func.func @_decoder_kernel(%arg0: i32, %arg1: memref<1x4x64xf32, #tpu.memory_space<vmem>>, %arg2: memref<64x403xbf16, #tpu.memory_space<vmem>>, %arg3: memref<8x64xbf16, #tpu.memory_space<vmem>>, %arg4: memref<8x1xf32, #tpu.memory_space<vmem>>, %arg5: memref<1x8x340xf32, #tpu.memory_space<vmem>>, %arg6: memref<64x340xf32, #tpu.memory_space<vmem>>) attributes {dimension_semantics = [#tpu.dimension_semantics<parallel>], iteration_bounds = array<i64: 2>, scalar_prefetch = 0 : i64, scratch_operands = 1 : i64, tpu.core_type = #tpu.core_type<tc>, window_params = [{transform_indices = @transform_0, window_bounds = array<i64: 1, 4, 64>}, {pipeline_mode = #tpu.pipeline_mode<synchronous>, transform_indices = @transform_1, window_bounds = array<i64: 64, 403>}, {pipeline_mode = #tpu.pipeline_mode<synchronous>, transform_indices = @transform_2, window_bounds = array<i64: 8, 64>}, {pipeline_mode = #tpu.pipeline_mode<synchronous>, transform_indices = @transform_3, window_bounds = array<i64: 8, 1>}, {transform_indices = @transform_4, window_bounds = array<i64: 1, 8, 340>}]} {
    %c0 = arith.constant 0 : index
    %c0_0 = arith.constant 0 : index
    %c0_1 = arith.constant 0 : index
    %0 = vector.load %arg1[%c0, %c0_0, %c0_1] : memref<1x4x64xf32, #tpu.memory_space<vmem>>, vector<1x4x64xf32>
    %1 = vector.shape_cast %0 : vector<1x4x64xf32> to vector<4x64xf32>
    %2 = arith.truncf %1 : vector<4x64xf32> to vector<4x64xbf16>
    %c0_2 = arith.constant 0 : index
    %c0_3 = arith.constant 0 : index
    %3 = vector.load %arg2[%c0_2, %c0_3] : memref<64x403xbf16, #tpu.memory_space<vmem>>, vector<64x403xbf16>
    %cst = arith.constant dense<0.000000e+00> : vector<4x403xf32>
    %4 = tpu.matmul %2, %3, %cst {dimension_numbers = #tpu.dot_dimension_numbers<[1], [0], [0], [1], [0, 0, 1, 1], [], []>} : vector<4x64xbf16>, vector<64x403xbf16>, vector<4x403xf32> -> vector<4x403xf32>
    %5 = vector.extract_strided_slice %4 {offsets = [0, 0], sizes = [4, 340], strides = [1, 1]} : vector<4x403xf32> to vector<4x340xf32>
    %c0_4 = arith.constant 0 : index
    %c0_5 = arith.constant 0 : index
    %6 = vector.load %arg6[%c0_4, %c0_5] : memref<64x340xf32, #tpu.memory_space<vmem>>, vector<4x340xf32>
    tpu.vector_store %arg6[%c0_4, %c0_5], %5 {strides = array<i32>} : memref<64x340xf32, #tpu.memory_space<vmem>>, vector<4x340xf32>,
    %7 = vector.extract_strided_slice %4 {offsets = [0, 1], sizes = [4, 340], strides = [1, 1]} : vector<4x403xf32> to vector<4x340xf32>
    %c4 = arith.constant 4 : index
    %c0_6 = arith.constant 0 : index
    %8 = vector.load %arg6[%c4, %c0_6] : memref<64x340xf32, #tpu.memory_space<vmem>>, vector<4x340xf32>
    tpu.vector_store %arg6[%c4, %c0_6], %7 {strides = array<i32>} : memref<64x340xf32, #tpu.memory_space<vmem>>, vector<4x340xf32>,
    %9 = vector.extract_strided_slice %4 {offsets = [0, 2], sizes = [4, 340], strides = [1, 1]} : vector<4x403xf32> to vector<4x340xf32>
    %c8 = arith.constant 8 : index
    %c0_7 = arith.constant 0 : index
    %10 = vector.load %arg6[%c8, %c0_7] : memref<64x340xf32, #tpu.memory_space<vmem>>, vector<4x340xf32>
    tpu.vector_store %arg6[%c8, %c0_7], %9 {strides = array<i32>} : memref<64x340xf32, #tpu.memory_space<vmem>>, vector<4x340xf32>,
    %11 = vector.extract_strided_slice %4 {offsets = [0, 3], sizes = [4, 340], strides = [1, 1]} : vector<4x403xf32> to vector<4x340xf32>
    %c12 = arith.constant 12 : index
    %c0_8 = arith.constant 0 : index
    %12 = vector.load %arg6[%c12, %c0_8] : memref<64x340xf32, #tpu.memory_space<vmem>>, vector<4x340xf32>
    tpu.vector_store %arg6[%c12, %c0_8], %11 {strides = array<i32>} : memref<64x340xf32, #tpu.memory_space<vmem>>, vector<4x340xf32>,
    %13 = vector.extract_strided_slice %4 {offsets = [0, 20], sizes = [4, 340], strides = [1, 1]} : vector<4x403xf32> to vector<4x340xf32>
    %c16 = arith.constant 16 : index
    %c0_9 = arith.constant 0 : index
    %14 = vector.load %arg6[%c16, %c0_9] : memref<64x340xf32, #tpu.memory_space<vmem>>, vector<4x340xf32>
    tpu.vector_store %arg6[%c16, %c0_9], %13 {strides = array<i32>} : memref<64x340xf32, #tpu.memory_space<vmem>>, vector<4x340xf32>,
    %15 = vector.extract_strided_slice %4 {offsets = [0, 21], sizes = [4, 340], strides = [1, 1]} : vector<4x403xf32> to vector<4x340xf32>
    %c20 = arith.constant 20 : index
    %c0_10 = arith.constant 0 : index
    %16 = vector.load %arg6[%c20, %c0_10] : memref<64x340xf32, #tpu.memory_space<vmem>>, vector<4x340xf32>
    tpu.vector_store %arg6[%c20, %c0_10], %15 {strides = array<i32>} : memref<64x340xf32, #tpu.memory_space<vmem>>, vector<4x340xf32>,
    %17 = vector.extract_strided_slice %4 {offsets = [0, 22], sizes = [4, 340], strides = [1, 1]} : vector<4x403xf32> to vector<4x340xf32>
    %c24 = arith.constant 24 : index
    %c0_11 = arith.constant 0 : index
    %18 = vector.load %arg6[%c24, %c0_11] : memref<64x340xf32, #tpu.memory_space<vmem>>, vector<4x340xf32>
    tpu.vector_store %arg6[%c24, %c0_11], %17 {strides = array<i32>} : memref<64x340xf32, #tpu.memory_space<vmem>>, vector<4x340xf32>,
    %19 = vector.extract_strided_slice %4 {offsets = [0, 23], sizes = [4, 340], strides = [1, 1]} : vector<4x403xf32> to vector<4x340xf32>
    %c28 = arith.constant 28 : index
    %c0_12 = arith.constant 0 : index
    %20 = vector.load %arg6[%c28, %c0_12] : memref<64x340xf32, #tpu.memory_space<vmem>>, vector<4x340xf32>
    tpu.vector_store %arg6[%c28, %c0_12], %19 {strides = array<i32>} : memref<64x340xf32, #tpu.memory_space<vmem>>, vector<4x340xf32>,
    %21 = vector.extract_strided_slice %4 {offsets = [0, 40], sizes = [4, 340], strides = [1, 1]} : vector<4x403xf32> to vector<4x340xf32>
    %c32 = arith.constant 32 : index
    %c0_13 = arith.constant 0 : index
    %22 = vector.load %arg6[%c32, %c0_13] : memref<64x340xf32, #tpu.memory_space<vmem>>, vector<4x340xf32>
    tpu.vector_store %arg6[%c32, %c0_13], %21 {strides = array<i32>} : memref<64x340xf32, #tpu.memory_space<vmem>>, vector<4x340xf32>,
    %23 = vector.extract_strided_slice %4 {offsets = [0, 41], sizes = [4, 340], strides = [1, 1]} : vector<4x403xf32> to vector<4x340xf32>
    %c36 = arith.constant 36 : index
    %c0_14 = arith.constant 0 : index
    %24 = vector.load %arg6[%c36, %c0_14] : memref<64x340xf32, #tpu.memory_space<vmem>>, vector<4x340xf32>
    tpu.vector_store %arg6[%c36, %c0_14], %23 {strides = array<i32>} : memref<64x340xf32, #tpu.memory_space<vmem>>, vector<4x340xf32>,
    %25 = vector.extract_strided_slice %4 {offsets = [0, 42], sizes = [4, 340], strides = [1, 1]} : vector<4x403xf32> to vector<4x340xf32>
    %c40 = arith.constant 40 : index
    %c0_15 = arith.constant 0 : index
    %26 = vector.load %arg6[%c40, %c0_15] : memref<64x340xf32, #tpu.memory_space<vmem>>, vector<4x340xf32>
    tpu.vector_store %arg6[%c40, %c0_15], %25 {strides = array<i32>} : memref<64x340xf32, #tpu.memory_space<vmem>>, vector<4x340xf32>,
    %27 = vector.extract_strided_slice %4 {offsets = [0, 43], sizes = [4, 340], strides = [1, 1]} : vector<4x403xf32> to vector<4x340xf32>
    %c44 = arith.constant 44 : index
    %c0_16 = arith.constant 0 : index
    %28 = vector.load %arg6[%c44, %c0_16] : memref<64x340xf32, #tpu.memory_space<vmem>>, vector<4x340xf32>
    tpu.vector_store %arg6[%c44, %c0_16], %27 {strides = array<i32>} : memref<64x340xf32, #tpu.memory_space<vmem>>, vector<4x340xf32>,
    %29 = vector.extract_strided_slice %4 {offsets = [0, 60], sizes = [4, 340], strides = [1, 1]} : vector<4x403xf32> to vector<4x340xf32>
    %c48 = arith.constant 48 : index
    %c0_17 = arith.constant 0 : index
    %30 = vector.load %arg6[%c48, %c0_17] : memref<64x340xf32, #tpu.memory_space<vmem>>, vector<4x340xf32>
    tpu.vector_store %arg6[%c48, %c0_17], %29 {strides = array<i32>} : memref<64x340xf32, #tpu.memory_space<vmem>>, vector<4x340xf32>,
    %31 = vector.extract_strided_slice %4 {offsets = [0, 61], sizes = [4, 340], strides = [1, 1]} : vector<4x403xf32> to vector<4x340xf32>
    %c52 = arith.constant 52 : index
    %c0_18 = arith.constant 0 : index
    %32 = vector.load %arg6[%c52, %c0_18] : memref<64x340xf32, #tpu.memory_space<vmem>>, vector<4x340xf32>
    tpu.vector_store %arg6[%c52, %c0_18], %31 {strides = array<i32>} : memref<64x340xf32, #tpu.memory_space<vmem>>, vector<4x340xf32>,
    %33 = vector.extract_strided_slice %4 {offsets = [0, 62], sizes = [4, 340], strides = [1, 1]} : vector<4x403xf32> to vector<4x340xf32>
    %c56 = arith.constant 56 : index
    %c0_19 = arith.constant 0 : index
    %34 = vector.load %arg6[%c56, %c0_19] : memref<64x340xf32, #tpu.memory_space<vmem>>, vector<4x340xf32>
    tpu.vector_store %arg6[%c56, %c0_19], %33 {strides = array<i32>} : memref<64x340xf32, #tpu.memory_space<vmem>>, vector<4x340xf32>,
    %35 = vector.extract_strided_slice %4 {offsets = [0, 63], sizes = [4, 340], strides = [1, 1]} : vector<4x403xf32> to vector<4x340xf32>
    %c60 = arith.constant 60 : index
    %c0_20 = arith.constant 0 : index
    %36 = vector.load %arg6[%c60, %c0_20] : memref<64x340xf32, #tpu.memory_space<vmem>>, vector<4x340xf32>
    tpu.vector_store %arg6[%c60, %c0_20], %35 {strides = array<i32>} : memref<64x340xf32, #tpu.memory_space<vmem>>, vector<4x340xf32>,
    %c0_21 = arith.constant 0 : index
    %c0_22 = arith.constant 0 : index
    %37 = vector.load %arg3[%c0_21, %c0_22] : memref<8x64xbf16, #tpu.memory_space<vmem>>, vector<8x64xbf16>
    %c0_23 = arith.constant 0 : index
    %c0_24 = arith.constant 0 : index
    %38 = vector.load %arg6[%c0_23, %c0_24] : memref<64x340xf32, #tpu.memory_space<vmem>>, vector<64x340xf32>
    %39 = arith.truncf %38 : vector<64x340xf32> to vector<64x340xbf16>
    %cst_25 = arith.constant dense<0.000000e+00> : vector<8x340xf32>
    %40 = tpu.matmul %37, %39, %cst_25 {dimension_numbers = #tpu.dot_dimension_numbers<[1], [0], [0], [1], [0, 0, 1, 1], [], []>} : vector<8x64xbf16>, vector<64x340xbf16>, vector<8x340xf32> -> vector<8x340xf32>
    %c0_26 = arith.constant 0 : index
    %c0_27 = arith.constant 0 : index
    %41 = vector.load %arg4[%c0_26, %c0_27] : memref<8x1xf32, #tpu.memory_space<vmem>>, vector<8x1xf32>
    %42 = vector.broadcast %41 : vector<8x1xf32> to vector<8x340xf32>
    %43 = arith.addf %40, %42 : vector<8x340xf32>
    %cst_28 = arith.constant 0.000000e+00 : f32
    %44 = vector.broadcast %cst_28 : f32 to vector<8x340xf32>
    %45 = arith.maximumf %43, %44 : vector<8x340xf32>
    %c0_29 = arith.constant 0 : index
    %c0_30 = arith.constant 0 : index
    %c0_31 = arith.constant 0 : index
    %46 = vector.load %arg5[%c0_29, %c0_30, %c0_31] : memref<1x8x340xf32, #tpu.memory_space<vmem>>, vector<1x8x340xf32>
    %47 = vector.shape_cast %46 : vector<1x8x340xf32> to vector<8x340xf32>
    %48 = vector.shape_cast %45 : vector<8x340xf32> to vector<1x8x340xf32>
    tpu.vector_store %arg5[%c0_29, %c0_30, %c0_31], %48 {strides = array<i32>} : memref<1x8x340xf32, #tpu.memory_space<vmem>>, vector<1x8x340xf32>,
    return
  }
  func.func @transform_0(%arg0: i32) -> (i32, i32, i32) {
    %c0_i32 = arith.constant 0 : i32
    %c0_i32_0 = arith.constant 0 : i32
    %c0_i32_1 = arith.constant 0 : i32
    return %arg0, %c0_i32, %c0_i32_0 : i32, i32, i32
  }
  func.func @transform_1(%arg0: i32) -> (i32, i32) {
    %c0_i32 = arith.constant 0 : i32
    %c0_i32_0 = arith.constant 0 : i32
    %c0_i32_1 = arith.constant 0 : i32
    return %c0_i32, %c0_i32_0 : i32, i32
  }
  func.func @transform_2(%arg0: i32) -> (i32, i32) {
    %c0_i32 = arith.constant 0 : i32
    %c0_i32_0 = arith.constant 0 : i32
    %c0_i32_1 = arith.constant 0 : i32
    return %c0_i32, %c0_i32_0 : i32, i32
  }
  func.func @transform_3(%arg0: i32) -> (i32, i32) {
    %c0_i32 = arith.constant 0 : i32
    %c0_i32_0 = arith.constant 0 : i32
    %c0_i32_1 = arith.constant 0 : i32
    return %c0_i32, %c0_i32_0 : i32, i32
  }
  func.func @transform_4(%arg0: i32) -> (i32, i32, i32) {
    %c0_i32 = arith.constant 0 : i32
    %c0_i32_0 = arith.constant 0 : i32
    %c0_i32_1 = arith.constant 0 : i32
    return %arg0, %c0_i32, %c0_i32_0 : i32, i32, i32
  }
}

</mosaic_0001>

<llo_original>
// kernel: decoder_layer_forward.1
$region0: #{decoder_layer_forward.1}
  #allocation0 [shape = 'u32[]', space=smem, size = 0x4, offset = 0x4, fixed_abs, tag = 'smem constant byte address 0x4 - core index']
  #allocation1 [shape = 'u32[144,128]{1,0:T(1,128)}', space=vmem, size = 0x12000, scoped, tag = 'internal scratch']
  #allocation2 [shape = 'f32[64,340]{1,0:T(8,128)}', space=vmem, size = 0x18000, scoped, tag = 'scratch operand']
  %s0 = inlined_call_operand.vmem [shape: f32[2,4,64], index: 0, kind: input, shape index: {}]
  %s1 = inlined_call_operand.vmem [shape: bf16[64,403], index: 1, kind: input, shape index: {}]
  %s2 = inlined_call_operand.vmem [shape: bf16[8,64], index: 2, kind: input, shape index: {}]
  %s3 = inlined_call_operand.vmem [shape: f32[8,1], index: 3, kind: input, shape index: {}]
  %s4 = inlined_call_operand.vmem [shape: f32[2,8,340], index: 4, kind: output, shape index: {}]
  %s5 = sld [smem:[#allocation0]]
  $region49: #{decoder_layer_forward.1} parent=0
    _
  %s7 = ssub.s32 1, %s5
  %s8 = scalar_select 0, %s7, %s5
  loop: start=0, step=1, limit=4
  $region2: #{decoder_layer_forward.1} parent=0 // loop_pre_header
    _
  $region3: #{decoder_layer_forward.1} parent=0 // loop_header
    %s10 = sphi 0, %s14
    %p11 = scmp.ge.s32.totalorder %s10, 4
    %s20 = sphi 0, %s22
    %s23 = sphi 0, %s20
    %s24 = sphi 0, %s23
    %s40 = sphi 0, %s24
    %s44 = sphi 0, %s44
    %s46 = sphi 0, %s44
    %s47 = sphi 0, %s46
    %s61 = sphi 0, %s47
    %s65 = sphi 0, %s65
    %s67 = sphi 0, %s65
    %s68 = sphi 0, %s67
    %s82 = sphi 0, %s68
    %s86 = sphi 0, %s86
    %s88 = sphi 0, %s86
    %s89 = sphi 0, %s88
    %s103 = sphi 0, %s89
    %s109 = sphi 0, %s111
    %s112 = sphi 0, %s109
    %s113 = sphi 0, %s112
    %s129 = sphi 0, %s113
  $region4: #{decoder_layer_forward.1} parent=0 // loop_header_branch
    %13 = sbr.rel (%p11) target = $region8
  $region5: #{decoder_layer_forward.1} parent=0 // loop_body
    %s15 = ssub.s32 %s10, 1
    %s16 = ssub.s32 %s10, 2
    %s17 = sadd.s32 %s10, 1
    %s18 = ssub.s32 %s10, %s17
    %p19 = scmp.eq.s32.totalorder %s18, 0
    %s21 = sadd.s32 %s20, 1
    %s22 = scalar_select %p19, %s20, %s21
    %p25 = pneg %p19
    %p26 = scmp.eq.s32.totalorder %s10, 1
    %p27 = por %p25, %p26
    %p28 = scmp.ne.s32.totalorder %s20, %s23
    %p29 = scmp.eq.s32.totalorder %s10, 0
    %p30 = por %p28, %p29
    %p31 = scmp.ne.s32.totalorder %s20, %s23
    %p32 = scmp.eq.s32.totalorder %s15, 1
    %p33 = por %p31, %p32
    %p34 = scmp.ne.s32.totalorder %s23, %s24
    %p35 = scmp.eq.s32.totalorder %s15, 0
    %p36 = por %p34, %p35
    %p37 = scmp.ne.s32.totalorder %s23, %s24
    %p38 = scmp.eq.s32.totalorder %s16, 1
    %p39 = por %p37, %p38
    %p41 = scmp.ne.s32.totalorder %s24, %s40
    %p42 = scmp.eq.s32.totalorder %s16, 0
    %p43 = por %p41, %p42
    %s45 = sadd.s32 %s44, 1
    %p48 = scmp.eq.s32.totalorder %s10, 1
    %p49 = scmp.ne.s32.totalorder %s44, %s46
    %p50 = scmp.eq.s32.totalorder %s10, 0
    %p51 = por %p49, %p50
    %p52 = scmp.ne.s32.totalorder %s44, %s46
    %p53 = scmp.eq.s32.totalorder %s15, 1
    %p54 = por %p52, %p53
    %p55 = scmp.ne.s32.totalorder %s46, %s47
    %p56 = scmp.eq.s32.totalorder %s15, 0
    %p57 = por %p55, %p56
    %p58 = scmp.ne.s32.totalorder %s46, %s47
    %p59 = scmp.eq.s32.totalorder %s16, 1
    %p60 = por %p58, %p59
    %p62 = scmp.ne.s32.totalorder %s47, %s61
    %p63 = scmp.eq.s32.totalorder %s16, 0
    %p64 = por %p62, %p63
    %s66 = sadd.s32 %s65, 1
    %p69 = scmp.eq.s32.totalorder %s10, 1
    %p70 = scmp.ne.s32.totalorder %s65, %s67
    %p71 = scmp.eq.s32.totalorder %s10, 0
    %p72 = por %p70, %p71
    %p73 = scmp.ne.s32.totalorder %s65, %s67
    %p74 = scmp.eq.s32.totalorder %s15, 1
    %p75 = por %p73, %p74
    %p76 = scmp.ne.s32.totalorder %s67, %s68
    %p77 = scmp.eq.s32.totalorder %s15, 0
    %p78 = por %p76, %p77
    %p79 = scmp.ne.s32.totalorder %s67, %s68
    %p80 = scmp.eq.s32.totalorder %s16, 1
    %p81 = por %p79, %p80
    %p83 = scmp.ne.s32.totalorder %s68, %s82
    %p84 = scmp.eq.s32.totalorder %s16, 0
    %p85 = por %p83, %p84
    %s87 = sadd.s32 %s86, 1
    %p90 = scmp.eq.s32.totalorder %s10, 1
    %p91 = scmp.ne.s32.totalorder %s86, %s88
    %p92 = scmp.eq.s32.totalorder %s10, 0
    %p93 = por %p91, %p92
    %p94 = scmp.ne.s32.totalorder %s86, %s88
    %p95 = scmp.eq.s32.totalorder %s15, 1
    %p96 = por %p94, %p95
    %p97 = scmp.ne.s32.totalorder %s88, %s89
    %p98 = scmp.eq.s32.totalorder %s15, 0
    %p99 = por %p97, %p98
    %p100 = scmp.ne.s32.totalorder %s88, %s89
    %p101 = scmp.eq.s32.totalorder %s16, 1
    %p102 = por %p100, %p101
    %p104 = scmp.ne.s32.totalorder %s89, %s103
    %p105 = scmp.eq.s32.totalorder %s16, 0
    %p106 = por %p104, %p105
    %s107 = ssub.s32 %s10, %s17
    %p108 = scmp.eq.s32.totalorder %s107, 0
    %s110 = sadd.s32 %s109, 1
    %s111 = scalar_select %p108, %s109, %s110
    %p114 = pneg %p108
    %p115 = scmp.eq.s32.totalorder %s10, 1
    %p116 = por %p114, %p115
    %p117 = scmp.ne.s32.totalorder %s109, %s112
    %p118 = scmp.eq.s32.totalorder %s10, 0
    %p119 = por %p117, %p118
    %p120 = scmp.ne.s32.totalorder %s109, %s112
    %p121 = scmp.eq.s32.totalorder %s15, 1
    %p122 = por %p120, %p121
    %p123 = scmp.ne.s32.totalorder %s112, %s113
    %p124 = scmp.eq.s32.totalorder %s15, 0
    %p125 = por %p123, %p124
    %p126 = scmp.ne.s32.totalorder %s112, %s113
    %p127 = scmp.eq.s32.totalorder %s16, 1
    %p128 = por %p126, %p127
    %p130 = scmp.ne.s32.totalorder %s113, %s129
    %p131 = scmp.eq.s32.totalorder %s16, 0
    %p132 = por %p130, %p131
    %p133 = scmp.le.s32.totalorder 1, %s10
    %p134 = scmp.lt.s32.totalorder %s10, 3
    %p135 = pnand %p133, %p134
    %p136 = pneg %p135
    // Predicated region
    $region9: #{decoder_layer_forward.1} parent=5 // pred_check
      _
    $region10: #{decoder_layer_forward.1} parent=5 // pred_check_branch
      %138 = sbr.rel (%p135) target = $region12
    $region11: #{decoder_layer_forward.1} parent=5 // pred_region
      %s139 = ssub.s32 %s10, 1
      // Predicated region
      $region13: #{decoder_layer_forward.1} parent=11 // pred_check
        %p140 = pneg %p57
      $region14: #{decoder_layer_forward.1} parent=11 // pred_check_branch
        %142 = sbr.rel (%p140) target = $region16
      $region15: #{decoder_layer_forward.1} parent=11 // pred_region
        _
      $region16: #{decoder_layer_forward.1} parent=11 // pred_fallthru
        _
      // Predicated region
      $region17: #{decoder_layer_forward.1} parent=11 // pred_check
        %p143 = pneg %p78
      $region18: #{decoder_layer_forward.1} parent=11 // pred_check_branch
        %145 = sbr.rel (%p143) target = $region20
      $region19: #{decoder_layer_forward.1} parent=11 // pred_region
        _
      $region20: #{decoder_layer_forward.1} parent=11 // pred_fallthru
        _
      // Predicated region
      $region21: #{decoder_layer_forward.1} parent=11 // pred_check
        %p146 = pneg %p99
      $region22: #{decoder_layer_forward.1} parent=11 // pred_check_branch
        %148 = sbr.rel (%p146) target = $region24
      $region23: #{decoder_layer_forward.1} parent=11 // pred_region
        _
      $region24: #{decoder_layer_forward.1} parent=11 // pred_fallthru
        _
    $region12: #{decoder_layer_forward.1} parent=5 // pred_fallthru
      _
    %p149 = scmp.lt.s32.totalorder %s10, 2
    // Predicated region
    $region25: #{decoder_layer_forward.1} parent=5 // pred_check
      %p150 = pneg %p149
    $region26: #{decoder_layer_forward.1} parent=5 // pred_check_branch
      %152 = sbr.rel (%p150) target = $region28
    $region27: #{decoder_layer_forward.1} parent=5 // pred_region
      // Predicated region
      $region29: #{decoder_layer_forward.1} parent=27 // pred_check
        %p153 = pneg %p30
      $region30: #{decoder_layer_forward.1} parent=27 // pred_check_branch
        %155 = sbr.rel (%p153) target = $region32
      $region31: #{decoder_layer_forward.1} parent=27 // pred_region
        %p156 = scmp.lt.s32.totalorder %s10, 1
        %s157 = scalar_select %p156, %s10, 1
        %s158 = smul.addr %s157, 4
        %s159 = scalar_lea.vmem %s0, %s158
      $region32: #{decoder_layer_forward.1} parent=27 // pred_fallthru
        _
    $region28: #{decoder_layer_forward.1} parent=5 // pred_fallthru
      _
    %p160 = scmp.le.s32.totalorder 1, %s10
    %p161 = scmp.lt.s32.totalorder %s10, 3
    %p162 = pnand %p160, %p161
    %p163 = pneg %p162
    // Predicated region
    $region33: #{decoder_layer_forward.1} parent=5 // pred_check
      _
    $region34: #{decoder_layer_forward.1} parent=5 // pred_check_branch
      %165 = sbr.rel (%p162) target = $region36
    $region35: #{decoder_layer_forward.1} parent=5 // pred_region
      %s166 = ssub.s32 %s10, 1
      %p167 = scmp.lt.s32.totalorder %s15, 1
      %s168 = scalar_select %p167, %s15, 1
      %s169 = smul.addr %s168, 4
      %s170 = scalar_lea.vmem %s0, %s169
      %p171 = pneg %p36
      %p172 = pneg %p33
      %p173 = pneg %p57
      %p174 = pneg %p54
      %p175 = pneg %p78
      %p176 = pneg %p75
      %p177 = pneg %p99
      %p178 = pneg %p96
      %p179 = pneg %p125
      %p180 = pneg %p122
      %p181 = scmp.lt.s32.totalorder %s15, 1
      %s182 = scalar_select %p181, %s15, 1
      %s183 = smul.addr %s182, 3
      %s184 = smul.addr %s183, 8
      %s185 = scalar_lea.vmem %s4, %s184
      %p186 = scmp.lt.s32.totalorder %s15, 1
      %s187 = scalar_select %p186, %s15, 1
      %s188 = smul.addr %s187, 4
      %s189 = scalar_lea.vmem %s0, %s188
      %p190 = scmp.lt.s32.totalorder %s15, 1
      %s191 = scalar_select %p190, %s15, 1
      %s192 = smul.addr %s191, 3
      %s193 = smul.addr %s192, 8
      %s194 = scalar_lea.vmem %s4, %s193
      %v196 = vld [vmem:[%s189] sm:$0xf]
      %v197 = vpack.c.bf16 %v196, %v196
      %v198 = vld [vmem:[%s1] sm:$0xff]
      %v199 = vld [vmem:[%s1 + $0x8] sm:$0xff]
      %v200 = vld [vmem:[%s1 + $0x10] sm:$0xff]
      %v201 = vld [vmem:[%s1 + $0x18] sm:$0xff]
      %v202 = vld [vmem:[%s1 + $0x20] sm:$0xff]
      %v203 = vld [vmem:[%s1 + $0x28] sm:$0xff]
      %v204 = vld [vmem:[%s1 + $0x30] sm:$0xff]
      %v205 = vld [vmem:[%s1 + $0x38] sm:$0xff]
      %v206 = vld [vmem:[%s1 + $0x40] sm:$0xff]
      %v207 = vld [vmem:[%s1 + $0x48] sm:$0xff]
      %v208 = vld [vmem:[%s1 + $0x50] sm:$0xff]
      %v209 = vld [vmem:[%s1 + $0x58] sm:$0xff]
      %v210 = vld [vmem:[%s1 + $0x60] sm:$0xff]
      %v211 = vld [vmem:[%s1 + $0x68] sm:$0xff]
      %v212 = vld [vmem:[%s1 + $0x70] sm:$0xff]
      %v213 = vld [vmem:[%s1 + $0x78] sm:$0xff]
      %v230 = vunpack.c.l.b16 %v198
      %v231 = vunpack.c.h.b16 %v198
      %v232 = vunpack.c.l.b16 %v199
      %v233 = vunpack.c.h.b16 %v199
      %v234 = vunpack.c.l.b16 %v200
      %v235 = vunpack.c.h.b16 %v200
      %v236 = vunpack.c.l.b16 %v201
      %v237 = vunpack.c.h.b16 %v201
      %v238 = vunpack.c.l.b16 %v202
      %v239 = vunpack.c.h.b16 %v202
      %v240 = vunpack.c.l.b16 %v203
      %v241 = vunpack.c.h.b16 %v203
      %v242 = vunpack.c.l.b16 %v204
      %v243 = vunpack.c.h.b16 %v204
      %v244 = vunpack.c.l.b16 %v205
      %v245 = vunpack.c.h.b16 %v205
      %v246 = vunpack.c.l.b16 %v206
      %v247 = vunpack.c.h.b16 %v206
      %v248 = vunpack.c.l.b16 %v207
      %v249 = vunpack.c.h.b16 %v207
      %v250 = vunpack.c.l.b16 %v208
      %v251 = vunpack.c.h.b16 %v208
      %v252 = vunpack.c.l.b16 %v209
      %v253 = vunpack.c.h.b16 %v209
      %v254 = vunpack.c.l.b16 %v210
      %v255 = vunpack.c.h.b16 %v210
      %v256 = vunpack.c.l.b16 %v211
      %v257 = vunpack.c.h.b16 %v211
      %v258 = vunpack.c.l.b16 %v212
      %v259 = vunpack.c.h.b16 %v212
      %v260 = vunpack.c.l.b16 %v213
      %v261 = vunpack.c.h.b16 %v213
      %v262 = vpack.c.b16 %v234, %v230
      %v263 = vpack.c.b16 %v235, %v231
      %v264 = vpack.c.b16 %v236, %v232
      %v265 = vpack.c.b16 %v237, %v233
      %v266 = vpack.c.b16 %v242, %v238
      %v267 = vpack.c.b16 %v243, %v239
      %v268 = vpack.c.b16 %v244, %v240
      %v269 = vpack.c.b16 %v245, %v241
      %v270 = vpack.c.b16 %v250, %v246
      %v271 = vpack.c.b16 %v251, %v247
      %v272 = vpack.c.b16 %v252, %v248
      %v273 = vpack.c.b16 %v253, %v249
      %v274 = vpack.c.b16 %v258, %v254
      %v275 = vpack.c.b16 %v259, %v255
      %v276 = vpack.c.b16 %v260, %v256
      %v277 = vpack.c.b16 %v261, %v257
      %vm294 = vcmask 523264
      %v296 = vsel %vm294, %v197, 0
      %298 = vmatprep.subr.bf16.mxu0 %v263
      %299 = vmatpush1.bf16.msra.mxu0 %v262
      %300 = vmatprep.subr.bf16.mxu0 %v267
      %301 = vmatpush1.bf16.msra.mxu0 %v266
      %302 = vmatprep.subr.bf16.mxu0 %v271
      %303 = vmatpush1.bf16.msra.mxu0 %v270
      %304 = vmatprep.subr.bf16.mxu0 %v275
      %305 = vmatpush1.bf16.msra.mxu0 %v274
      %306 = vmatprep.subr.bf16.mxu0 0
      %307 = vmatpush1.bf16.msra.mxu0 0
      %308 = vmatprep.subr.bf16.mxu0 0
      %309 = vmatpush1.bf16.msra.mxu0 0
      %310 = vmatprep.subr.bf16.mxu0 0
      %311 = vmatpush1.bf16.msra.mxu0 0
      %312 = vmatprep.subr.bf16.mxu0 0
      %313 = vmatpush1.bf16.msra.mxu0 0
      %314 = vmatprep.subr.bf16.mxu0 0
      %315 = vmatpush1.bf16.msra.mxu0 0
      %316 = vmatprep.subr.bf16.mxu0 0
      %317 = vmatpush1.bf16.msra.mxu0 0
      %318 = vmatprep.subr.bf16.mxu0 0
      %319 = vmatpush1.bf16.msra.mxu0 0
      %320 = vmatprep.subr.bf16.mxu0 0
      %321 = vmatpush1.bf16.msra.mxu0 0
      %322 = vmatprep.subr.bf16.mxu0 0
      %323 = vmatpush1.bf16.msra.mxu0 0
      %324 = vmatprep.subr.bf16.mxu0 0
      %325 = vmatpush1.bf16.msra.mxu0 0
      %326 = vmatprep.subr.bf16.mxu0 0
      %327 = vmatpush1.bf16.msra.mxu0 0
      %328 = vmatprep.subr.bf16.mxu0 0
      %329 = vmatpush1.bf16.msra.mxu0 0
      %330 = vmatprep.mubr.bf16.mxu0 0
      %331 = vmatmul.mubr.bf16.gmra.mrb[0].mxu0 %v296
      %v332 = vpop.f32.mrb[0].mxu0
      %v333 = vadd.f32 0.0, %v332
      %v334 = vpop.f32.mrb[0].mxu0
      %v335 = vadd.f32 0.0, %v334
      %v336 = vpop.f32.mrb[0].mxu0
      %v337 = vpop.f32.mrb[0].mxu0
      %338 = vdwg.mxu0
      %339 = vmatprep.subr.bf16.mxu0 %v265
      %340 = vmatpush1.bf16.msra.mxu0 %v264
      %341 = vmatprep.subr.bf16.mxu0 %v269
      %342 = vmatpush1.bf16.msra.mxu0 %v268
      %343 = vmatprep.subr.bf16.mxu0 %v273
      %344 = vmatpush1.bf16.msra.mxu0 %v272
      %345 = vmatprep.subr.bf16.mxu0 %v277
      %346 = vmatpush1.bf16.msra.mxu0 %v276
      %347 = vmatprep.subr.bf16.mxu0 0
      %348 = vmatpush1.bf16.msra.mxu0 0
      %349 = vmatprep.subr.bf16.mxu0 0
      %350 = vmatpush1.bf16.msra.mxu0 0
      %351 = vmatprep.subr.bf16.mxu0 0
      %352 = vmatpush1.bf16.msra.mxu0 0
      %353 = vmatprep.subr.bf16.mxu0 0
      %354 = vmatpush1.bf16.msra.mxu0 0
      %355 = vmatprep.subr.bf16.mxu0 0
      %356 = vmatpush1.bf16.msra.mxu0 0
      %357 = vmatprep.subr.bf16.mxu0 0
      %358 = vmatpush1.bf16.msra.mxu0 0
      %359 = vmatprep.subr.bf16.mxu0 0
      %360 = vmatpush1.bf16.msra.mxu0 0
      %361 = vmatprep.subr.bf16.mxu0 0
      %362 = vmatpush1.bf16.msra.mxu0 0
      %363 = vmatprep.subr.bf16.mxu0 0
      %364 = vmatpush1.bf16.msra.mxu0 0
      %365 = vmatprep.subr.bf16.mxu0 0
      %366 = vmatpush1.bf16.msra.mxu0 0
      %367 = vmatprep.subr.bf16.mxu0 0
      %368 = vmatpush1.bf16.msra.mxu0 0
      %369 = vmatprep.subr.bf16.mxu0 0
      %370 = vmatpush1.bf16.msra.mxu0 0
      %371 = vmatprep.mubr.bf16.mxu0 0
      %372 = vmatmul.mubr.bf16.gmra.mrb[0].mxu0 %v296
      %v373 = vpop.f32.mrb[0].mxu0
      %v374 = vadd.f32 0.0, %v373
      %v375 = vpop.f32.mrb[0].mxu0
      %v376 = vadd.f32 0.0, %v375
      %v377 = vpop.f32.mrb[0].mxu0
      %v378 = vpop.f32.mrb[0].mxu0
      %379 = vdwg.mxu0
      %380 = vst [vmem:[#allocation2] sm:$0xf] %v333
      %381 = vst [vmem:[#allocation2 + $0x8] sm:$0xf] %v335
      %vm382 = vcmask 683008
      %383 = vst.msk [vmem:[#allocation2 + $0x10] sm:$0xf] %vm382, %v374
      %v387 = vrot.slane %v333, 4
      %v388 = vrot.slane %v335, 4
      %v389 = vrot.slane %v374, 4
      %390 = vrot.lane.b32.xlu0 %v387, 127
      %v391 = vpop.permute.xlu0 %390
      %392 = vrot.lane.b32.xlu0 %v388, 127
      %v393 = vpop.permute.xlu0 %392
      %394 = vrot.lane.b32.xlu0 %v389, 127
      %v395 = vpop.permute.xlu0 %394
      %vm396 = vcmask 1039360
      %v397 = vsel %vm396, %v391, %v393
      %v398 = vsel %vm396, %v393, %v395
      %402 = vst [vmem:[#allocation2] sm:$0xf0] %v397
      %403 = vst [vmem:[#allocation2 + $0x8] sm:$0xf0] %v398
      %vm404 = vcmask 687108
      %405 = vst.msk [vmem:[#allocation2 + $0x10] sm:$0xf0] %vm404, %v395
      %406 = vrot.lane.b32.xlu0 %v333, 126
      %v407 = vpop.permute.xlu0 %406
      %408 = vrot.lane.b32.xlu0 %v335, 126
      %v409 = vpop.permute.xlu0 %408
      %410 = vrot.lane.b32.xlu0 %v374, 126
      %v411 = vpop.permute.xlu0 %410
      %vm412 = vcmask 1031168
      %v413 = vsel %vm412, %v407, %v409
      %v414 = vsel %vm412, %v409, %v411
      %418 = vst [vmem:[#allocation2 + $0x18] sm:$0xf] %v413
      %419 = vst [vmem:[#allocation2 + $0x20] sm:$0xf] %v414
      %420 = vst.msk [vmem:[#allocation2 + $0x28] sm:$0xf] %vm382, %v411
      %421 = vrot.lane.b32.xlu0 %v387, 125
      %v422 = vpop.permute.xlu0 %421
      %423 = vrot.lane.b32.xlu0 %v388, 125
      %v424 = vpop.permute.xlu0 %423
      %425 = vrot.lane.b32.xlu0 %v389, 125
      %v426 = vpop.permute.xlu0 %425
      %vm427 = vcmask 1022976
      %v428 = vsel %vm427, %v422, %v424
      %v429 = vsel %vm427, %v424, %v426
      %433 = vst [vmem:[#allocation2 + $0x18] sm:$0xf0] %v428
      %434 = vst [vmem:[#allocation2 + $0x20] sm:$0xf0] %v429
      %435 = vst.msk [vmem:[#allocation2 + $0x28] sm:$0xf0] %vm404, %v426
      %436 = vrot.lane.b32.xlu0 %v333, 108
      %v437 = vpop.permute.xlu0 %436
      %438 = vrot.lane.b32.xlu0 %v335, 108
      %v439 = vpop.permute.xlu0 %438
      %440 = vrot.lane.b32.xlu0 %v374, 108
      %v441 = vpop.permute.xlu0 %440
      %vm442 = vcmask 883712
      %v443 = vsel %vm442, %v437, %v439
      %v444 = vsel %vm442, %v439, %v441
      %448 = vst [vmem:[#allocation2 + $0x30] sm:$0xf] %v443
      %449 = vst [vmem:[#allocation2 + $0x38] sm:$0xf] %v444
      %450 = vst.msk [vmem:[#allocation2 + $0x40] sm:$0xf] %vm382, %v441
      %451 = vrot.lane.b32.xlu0 %v387, 107
      %v452 = vpop.permute.xlu0 %451
      %453 = vrot.lane.b32.xlu0 %v388, 107
      %v454 = vpop.permute.xlu0 %453
      %455 = vrot.lane.b32.xlu0 %v389, 107
      %v456 = vpop.permute.xlu0 %455
      %vm457 = vcmask 875520
      %v458 = vsel %vm457, %v452, %v454
      %v459 = vsel %vm457, %v454, %v456
      %463 = vst [vmem:[#allocation2 + $0x30] sm:$0xf0] %v458
      %464 = vst [vmem:[#allocation2 + $0x38] sm:$0xf0] %v459
      %465 = vst.msk [vmem:[#allocation2 + $0x40] sm:$0xf0] %vm404, %v456
      %466 = vrot.lane.b32.xlu0 %v333, 106
      %v467 = vpop.permute.xlu0 %466
      %468 = vrot.lane.b32.xlu0 %v335, 106
      %v469 = vpop.permute.xlu0 %468
      %470 = vrot.lane.b32.xlu0 %v374, 106
      %v471 = vpop.permute.xlu0 %470
      %vm472 = vcmask 867328
      %v473 = vsel %vm472, %v467, %v469
      %v474 = vsel %vm472, %v469, %v471
      %478 = vst [vmem:[#allocation2 + $0x48] sm:$0xf] %v473
      %479 = vst [vmem:[#allocation2 + $0x50] sm:$0xf] %v474
      %480 = vst.msk [vmem:[#allocation2 + $0x58] sm:$0xf] %vm382, %v471
      %481 = vrot.lane.b32.xlu0 %v387, 105
      %v482 = vpop.permute.xlu0 %481
      %483 = vrot.lane.b32.xlu0 %v388, 105
      %v484 = vpop.permute.xlu0 %483
      %485 = vrot.lane.b32.xlu0 %v389, 105
      %v486 = vpop.permute.xlu0 %485
      %vm487 = vcmask 859136
      %v488 = vsel %vm487, %v482, %v484
      %v489 = vsel %vm487, %v484, %v486
      %493 = vst [vmem:[#allocation2 + $0x48] sm:$0xf0] %v488
      %494 = vst [vmem:[#allocation2 + $0x50] sm:$0xf0] %v489
      %495 = vst.msk [vmem:[#allocation2 + $0x58] sm:$0xf0] %vm404, %v486
      %496 = vrot.lane.b32.xlu0 %v333, 88
      %v497 = vpop.permute.xlu0 %496
      %498 = vrot.lane.b32.xlu0 %v335, 88
      %v499 = vpop.permute.xlu0 %498
      %500 = vrot.lane.b32.xlu0 %v374, 88
      %v501 = vpop.permute.xlu0 %500
      %vm502 = vcmask 719872
      %v503 = vsel %vm502, %v497, %v499
      %v504 = vsel %vm502, %v499, %v501
      %508 = vst [vmem:[#allocation2 + $0x60] sm:$0xf] %v503
      %509 = vst [vmem:[#allocation2 + $0x68] sm:$0xf] %v504
      %510 = vst.msk [vmem:[#allocation2 + $0x70] sm:$0xf] %vm382, %v501
      %511 = vrot.lane.b32.xlu0 %v387, 87
      %v512 = vpop.permute.xlu0 %511
      %513 = vrot.lane.b32.xlu0 %v388, 87
      %v514 = vpop.permute.xlu0 %513
      %515 = vrot.lane.b32.xlu0 %v389, 87
      %v516 = vpop.permute.xlu0 %515
      %vm517 = vcmask 711680
      %v518 = vsel %vm517, %v512, %v514
      %v519 = vsel %vm517, %v514, %v516
      %523 = vst [vmem:[#allocation2 + $0x60] sm:$0xf0] %v518
      %524 = vst [vmem:[#allocation2 + $0x68] sm:$0xf0] %v519
      %525 = vst.msk [vmem:[#allocation2 + $0x70] sm:$0xf0] %vm404, %v516
      %526 = vrot.lane.b32.xlu0 %v333, 86
      %v527 = vpop.permute.xlu0 %526
      %528 = vrot.lane.b32.xlu0 %v335, 86
      %v529 = vpop.permute.xlu0 %528
      %530 = vrot.lane.b32.xlu0 %v374, 86
      %v531 = vpop.permute.xlu0 %530
      %vm532 = vcmask 703488
      %v533 = vsel %vm532, %v527, %v529
      %v534 = vsel %vm532, %v529, %v531
      %538 = vst [vmem:[#allocation2 + $0x78] sm:$0xf] %v533
      %539 = vst [vmem:[#allocation2 + $0x80] sm:$0xf] %v534
      %540 = vst.msk [vmem:[#allocation2 + $0x88] sm:$0xf] %vm382, %v531
      %541 = vrot.lane.b32.xlu0 %v387, 85
      %v542 = vpop.permute.xlu0 %541
      %543 = vrot.lane.b32.xlu0 %v388, 85
      %v544 = vpop.permute.xlu0 %543
      %545 = vrot.lane.b32.xlu0 %v389, 85
      %v546 = vpop.permute.xlu0 %545
      %vm547 = vcmask 695296
      %v548 = vsel %vm547, %v542, %v544
      %v549 = vsel %vm547, %v544, %v546
      %553 = vst [vmem:[#allocation2 + $0x78] sm:$0xf0] %v548
      %554 = vst [vmem:[#allocation2 + $0x80] sm:$0xf0] %v549
      %555 = vst.msk [vmem:[#allocation2 + $0x88] sm:$0xf0] %vm404, %v546
      %557 = vrot.lane.b32.xlu0 %v333, 68
      %v558 = vpop.permute.xlu0 %557
      %559 = vrot.lane.b32.xlu0 %v335, 68
      %v560 = vpop.permute.xlu0 %559
      %561 = vrot.lane.b32.xlu0 %v374, 68
      %v562 = vpop.permute.xlu0 %561
      %563 = vrot.lane.b32.xlu0 %v376, 68
      %v564 = vpop.permute.xlu0 %563
      %vm565 = vcmask 556032
      %v566 = vsel %vm565, %v558, %v560
      %v567 = vsel %vm565, %v560, %v562
      %v568 = vsel %vm565, %v562, %v564
      %572 = vst [vmem:[#allocation2 + $0x90] sm:$0xf] %v566
      %573 = vst [vmem:[#allocation2 + $0x98] sm:$0xf] %v567
      %574 = vst.msk [vmem:[#allocation2 + $0xa0] sm:$0xf] %vm382, %v568
      %v575 = vrot.slane %v376, 4
      %576 = vrot.lane.b32.xlu0 %v387, 67
      %v577 = vpop.permute.xlu0 %576
      %578 = vrot.lane.b32.xlu0 %v388, 67
      %v579 = vpop.permute.xlu0 %578
      %580 = vrot.lane.b32.xlu0 %v389, 67
      %v581 = vpop.permute.xlu0 %580
      %582 = vrot.lane.b32.xlu0 %v575, 67
      %v583 = vpop.permute.xlu0 %582
      %vm584 = vcmask 547840
      %v585 = vsel %vm584, %v577, %v579
      %v586 = vsel %vm584, %v579, %v581
      %v587 = vsel %vm584, %v581, %v583
      %591 = vst [vmem:[#allocation2 + $0x90] sm:$0xf0] %v585
      %592 = vst [vmem:[#allocation2 + $0x98] sm:$0xf0] %v586
      %593 = vst.msk [vmem:[#allocation2 + $0xa0] sm:$0xf0] %vm404, %v587
      %594 = vrot.lane.b32.xlu0 %v333, 66
      %v595 = vpop.permute.xlu0 %594
      %596 = vrot.lane.b32.xlu0 %v335, 66
      %v597 = vpop.permute.xlu0 %596
      %598 = vrot.lane.b32.xlu0 %v374, 66
      %v599 = vpop.permute.xlu0 %598
      %600 = vrot.lane.b32.xlu0 %v376, 66
      %v601 = vpop.permute.xlu0 %600
      %vm602 = vcmask 539648
      %v603 = vsel %vm602, %v595, %v597
      %v604 = vsel %vm602, %v597, %v599
      %v605 = vsel %vm602, %v599, %v601
      %609 = vst [vmem:[#allocation2 + $0xa8] sm:$0xf] %v603
      %610 = vst [vmem:[#allocation2 + $0xb0] sm:$0xf] %v604
      %611 = vst.msk [vmem:[#allocation2 + $0xb8] sm:$0xf] %vm382, %v605
      %612 = vrot.lane.b32.xlu0 %v387, 65
      %v613 = vpop.permute.xlu0 %612
      %614 = vrot.lane.b32.xlu0 %v388, 65
      %v615 = vpop.permute.xlu0 %614
      %616 = vrot.lane.b32.xlu0 %v389, 65
      %v617 = vpop.permute.xlu0 %616
      %618 = vrot.lane.b32.xlu0 %v575, 65
      %v619 = vpop.permute.xlu0 %618
      %vm620 = vcmask 531456
      %v621 = vsel %vm620, %v613, %v615
      %v622 = vsel %vm620, %v615, %v617
      %v623 = vsel %vm620, %v617, %v619
      %627 = vst [vmem:[#allocation2 + $0xa8] sm:$0xf0] %v621
      %628 = vst [vmem:[#allocation2 + $0xb0] sm:$0xf0] %v622
      %629 = vst.msk [vmem:[#allocation2 + $0xb8] sm:$0xf0] %vm404, %v623
      %v630 = vld [vmem:[%s2] sm:$0xf]
      %v631 = vld [vmem:[#allocation2] sm:$0xff]
      %v632 = vld [vmem:[#allocation2 + $0x8] sm:$0xff]
      %v633 = vld [vmem:[#allocation2 + $0x10] sm:$0xff]
      %v634 = vld [vmem:[#allocation2 + $0x18] sm:$0xff]
      %v635 = vld [vmem:[#allocation2 + $0x20] sm:$0xff]
      %v636 = vld [vmem:[#allocation2 + $0x28] sm:$0xff]
      %v637 = vld [vmem:[#allocation2 + $0x30] sm:$0xff]
      %v638 = vld [vmem:[#allocation2 + $0x38] sm:$0xff]
      %v639 = vld [vmem:[#allocation2 + $0x40] sm:$0xff]
      %v640 = vld [vmem:[#allocation2 + $0x48] sm:$0xff]
      %v641 = vld [vmem:[#allocation2 + $0x50] sm:$0xff]
      %v642 = vld [vmem:[#allocation2 + $0x58] sm:$0xff]
      %v643 = vld [vmem:[#allocation2 + $0x60] sm:$0xff]
      %v644 = vld [vmem:[#allocation2 + $0x68] sm:$0xff]
      %v645 = vld [vmem:[#allocation2 + $0x70] sm:$0xff]
      %v646 = vld [vmem:[#allocation2 + $0x78] sm:$0xff]
      %v647 = vld [vmem:[#allocation2 + $0x80] sm:$0xff]
      %v648 = vld [vmem:[#allocation2 + $0x88] sm:$0xff]
      %v649 = vld [vmem:[#allocation2 + $0x90] sm:$0xff]
      %v650 = vld [vmem:[#allocation2 + $0x98] sm:$0xff]
      %v651 = vld [vmem:[#allocation2 + $0xa0] sm:$0xff]
      %v652 = vld [vmem:[#allocation2 + $0xa8] sm:$0xff]
      %v653 = vld [vmem:[#allocation2 + $0xb0] sm:$0xff]
      %v654 = vld [vmem:[#allocation2 + $0xb8] sm:$0xff]
      %v655 = vpack.c.bf16 %v634, %v631
      %v656 = vpack.c.bf16 %v635, %v632
      %v657 = vpack.c.bf16 %v636, %v633
      %v658 = vpack.c.bf16 %v640, %v637
      %v659 = vpack.c.bf16 %v641, %v638
      %v660 = vpack.c.bf16 %v642, %v639
      %v661 = vpack.c.bf16 %v646, %v643
      %v662 = vpack.c.bf16 %v647, %v644
      %v663 = vpack.c.bf16 %v648, %v645
      %v664 = vpack.c.bf16 %v652, %v649
      %v665 = vpack.c.bf16 %v653, %v650
      %v666 = vpack.c.bf16 %v654, %v651
      %v667 = vld [vmem:[%s3] sm:$0xff]
      %669 = vset.pattern.permute.xlu0 0
      %670 = vperm.xlu0 %669, %v667
      %v671 = vpop.permute.xlu0 %670
      %v674 = vsel %vm294, %v630, 0
      %676 = vmatprep.subr.bf16.mxu0 %v656
      %677 = vmatpush1.bf16.msra.mxu0 %v655
      %678 = vmatprep.subr.bf16.mxu0 %v659
      %679 = vmatpush1.bf16.msra.mxu0 %v658
      %680 = vmatprep.subr.bf16.mxu0 %v662
      %681 = vmatpush1.bf16.msra.mxu0 %v661
      %682 = vmatprep.subr.bf16.mxu0 %v665
      %683 = vmatpush1.bf16.msra.mxu0 %v664
      %684 = vmatprep.subr.bf16.mxu0 0
      %685 = vmatpush1.bf16.msra.mxu0 0
      %686 = vmatprep.subr.bf16.mxu0 0
      %687 = vmatpush1.bf16.msra.mxu0 0
      %688 = vmatprep.subr.bf16.mxu0 0
      %689 = vmatpush1.bf16.msra.mxu0 0
      %690 = vmatprep.subr.bf16.mxu0 0
      %691 = vmatpush1.bf16.msra.mxu0 0
      %692 = vmatprep.subr.bf16.mxu0 0
      %693 = vmatpush1.bf16.msra.mxu0 0
      %694 = vmatprep.subr.bf16.mxu0 0
      %695 = vmatpush1.bf16.msra.mxu0 0
      %696 = vmatprep.subr.bf16.mxu0 0
      %697 = vmatpush1.bf16.msra.mxu0 0
      %698 = vmatprep.subr.bf16.mxu0 0
      %699 = vmatpush1.bf16.msra.mxu0 0
      %700 = vmatprep.subr.bf16.mxu0 0
      %701 = vmatpush1.bf16.msra.mxu0 0
      %702 = vmatprep.subr.bf16.mxu0 0
      %703 = vmatpush1.bf16.msra.mxu0 0
      %704 = vmatprep.subr.bf16.mxu0 0
      %705 = vmatpush1.bf16.msra.mxu0 0
      %706 = vmatprep.subr.bf16.mxu0 0
      %707 = vmatpush1.bf16.msra.mxu0 0
      %708 = vmatprep.mubr.bf16.mxu0 0
      %709 = vmatmul.mubr.bf16.gmra.mrb[0].mxu0 %v674
      %v710 = vpop.f32.mrb[0].mxu0
      %v711 = vadd.f32 %v671, %v710
      %v712 = vpop.f32.mrb[0].mxu0
      %v713 = vadd.f32 %v671, %v712
      %v714 = vpop.f32.mrb[0].mxu0
      %v715 = vpop.f32.mrb[0].mxu0
      %716 = vdwg.mxu0
      %717 = vmatprep.subr.bf16.mxu0 0
      %718 = vmatpush1.bf16.msra.mxu0 %v657
      %719 = vmatprep.subr.bf16.mxu0 0
      %720 = vmatpush1.bf16.msra.mxu0 %v660
      %721 = vmatprep.subr.bf16.mxu0 0
      %722 = vmatpush1.bf16.msra.mxu0 %v663
      %723 = vmatprep.subr.bf16.mxu0 0
      %724 = vmatpush1.bf16.msra.mxu0 %v666
      %725 = vmatprep.subr.bf16.mxu0 0
      %726 = vmatpush1.bf16.msra.mxu0 0
      %727 = vmatprep.subr.bf16.mxu0 0
      %728 = vmatpush1.bf16.msra.mxu0 0
      %729 = vmatprep.subr.bf16.mxu0 0
      %730 = vmatpush1.bf16.msra.mxu0 0
      %731 = vmatprep.subr.bf16.mxu0 0
      %732 = vmatpush1.bf16.msra.mxu0 0
      %733 = vmatprep.subr.bf16.mxu0 0
      %734 = vmatpush1.bf16.msra.mxu0 0
      %735 = vmatprep.subr.bf16.mxu0 0
      %736 = vmatpush1.bf16.msra.mxu0 0
      %737 = vmatprep.subr.bf16.mxu0 0
      %738 = vmatpush1.bf16.msra.mxu0 0
      %739 = vmatprep.subr.bf16.mxu0 0
      %740 = vmatpush1.bf16.msra.mxu0 0
      %741 = vmatprep.subr.bf16.mxu0 0
      %742 = vmatpush1.bf16.msra.mxu0 0
      %743 = vmatprep.subr.bf16.mxu0 0
      %744 = vmatpush1.bf16.msra.mxu0 0
      %745 = vmatprep.subr.bf16.mxu0 0
      %746 = vmatpush1.bf16.msra.mxu0 0
      %747 = vmatprep.subr.bf16.mxu0 0
      %748 = vmatpush1.bf16.msra.mxu0 0
      %749 = vmatprep.mubr.bf16.mxu0 0
      %750 = vmatmul.mubr.bf16.gmra.mrb[0].mxu0 %v674
      %v751 = vpop.f32.mrb[0].mxu0
      %v752 = vadd.f32 %v671, %v751
      %v753 = vpop.f32.mrb[0].mxu0
      %v754 = vpop.f32.mrb[0].mxu0
      %v755 = vpop.f32.mrb[0].mxu0
      %756 = vdwg.mxu0
      %v757 = vmax.f32 %v711, 0.0
      %v758 = vmax.f32 %v713, 0.0
      %v759 = vmax.f32 %v752, 0.0
      %760 = vst [vmem:[%s194] sm:$0xff] %v757
      %761 = vst [vmem:[%s194 + $0x8] sm:$0xff] %v758
      %vm762 = vcmask 687104
      %763 = vst.msk [vmem:[%s194 + $0x10] sm:$0xff] %vm762, %v759
      %p764 = scmp.lt.s32.totalorder %s15, 1
      %s765 = scalar_select %p764, %s15, 1
      %s766 = smul.addr %s765, 3
      %s767 = smul.addr %s766, 8
      %s768 = scalar_lea.vmem %s4, %s767
      // Predicated region
      $region37: #{decoder_layer_forward.1} parent=35 // pred_check
        %p769 = pneg %p122
      $region38: #{decoder_layer_forward.1} parent=35 // pred_check_branch
        %771 = sbr.rel (%p769) target = $region40
      $region39: #{decoder_layer_forward.1} parent=35 // pred_region
        _
      $region40: #{decoder_layer_forward.1} parent=35 // pred_fallthru
        _
    $region36: #{decoder_layer_forward.1} parent=5 // pred_fallthru
      _
    %p772 = scmp.le.s32.totalorder 2, %s10
    // Predicated region
    $region41: #{decoder_layer_forward.1} parent=5 // pred_check
      %p773 = pneg %p772
    $region42: #{decoder_layer_forward.1} parent=5 // pred_check_branch
      %775 = sbr.rel (%p773) target = $region44
    $region43: #{decoder_layer_forward.1} parent=5 // pred_region
      %s776 = ssub.s32 %s10, 2
      // Predicated region
      $region45: #{decoder_layer_forward.1} parent=43 // pred_check
        %p777 = pneg %p128
      $region46: #{decoder_layer_forward.1} parent=43 // pred_check_branch
        %779 = sbr.rel (%p777) target = $region48
      $region47: #{decoder_layer_forward.1} parent=43 // pred_region
        %p780 = scmp.lt.s32.totalorder %s16, 1
        %s781 = scalar_select %p780, %s16, 1
        %s782 = smul.addr %s781, 3
        %s783 = smul.addr %s782, 8
        %s784 = scalar_lea.vmem %s4, %s783
      $region48: #{decoder_layer_forward.1} parent=43 // pred_fallthru
        _
    $region44: #{decoder_layer_forward.1} parent=5 // pred_fallthru
      _
  $region6: #{decoder_layer_forward.1} parent=0 // loop_footer
    %s14 = sadd.s32 1, %s10
  $region7: #{decoder_layer_forward.1} parent=0 // loop_footer_branch
    %9 = sbr.rel target = $region3
  $region8: #{decoder_layer_forward.1} parent=0 // loop_exit
    _

</llo_original>
